<compile_context>
chip_gen: v7x
topology: tpu7x:2x2x1
jax: 0.10.0
libtpu: 0.0.40
codegen_flags: <defaults>
</compile_context>

<pallas_src>
import jax
import jax.numpy as jnp
from jax.experimental import pallas as pl
from jax.experimental.pallas import tpu as pltpu

BATCH = 64      # fixed by the module: x.view(1, 64, signal_shape)
HIDDEN = 20     # dense1 out_features
OUT = 1         # dense2 out_features


def critic_x_kernel(x_ref, w1_ref, b1_ref, w2_ref, b2_ref, out_ref):
    """Single grid point; everything resident in VMEM.

    x_ref  : (64, S)   input rows (the view(1, 64, S) step, batch axis = 64)
    w1_ref : (S, 20)   dense1 weight, pre-transposed
    b1_ref : (1, 20)   dense1 bias (row)
    w2_ref : (20, 1)   dense2 weight, pre-transposed
    b2_ref : (1, 1)    dense2 bias (row)
    out_ref: (64, 1)
    """
    x = x_ref[...]
    h = jnp.dot(x, w1_ref[...], preferred_element_type=jnp.float32) + b1_ref[...]
    out_ref[...] = (
        jnp.dot(h, w2_ref[...], preferred_element_type=jnp.float32) + b2_ref[...]
    )


def prepare_params(params):
    """One-time packing of PyTorch-layout params into kernel layout.

    Hoisted out of the per-call path (transposes / reshapes are separate XLA
    ops whose dispatch cost rivals the kernel itself).
    """
    return {
        "w1": jnp.asarray(params["w1"], jnp.float32).T,          # (S, 20)
        "b1": jnp.asarray(params["b1"], jnp.float32)[None, :],   # (1, 20)
        "w2": jnp.asarray(params["w2"], jnp.float32).T,          # (20, 1)
        "b2": jnp.asarray(params["b2"], jnp.float32)[None, :],   # (1, 1)
    }


def critic_x_forward(x, prepared):
    """x: any array with 64*signal_shape elements (mirrors x.view(1, 64, S))."""
    S = prepared["w1"].shape[0]
    x2d = jnp.reshape(x, (BATCH, S)).astype(jnp.float32)

    vmem = pltpu.MemorySpace.VMEM
    full = lambda: pl.BlockSpec(memory_space=vmem)

    out = pl.pallas_call(
        critic_x_kernel,
        out_shape=jax.ShapeDtypeStruct((BATCH, OUT), jnp.float32),
        in_specs=[full() for _ in range(5)],
        out_specs=full(),
    )(x2d, prepared["w1"], prepared["b1"], prepared["w2"], prepared["b2"])

    return out.reshape(1, BATCH, OUT)    # match PyTorch output shape (1, 64, 1)


def init_params(key, signal_shape):
    """Deterministic synthetic params with PyTorch nn.Linear shapes."""
    ks = jax.random.split(key, 4)
    u = lambda k, shape, s: jax.random.uniform(k, shape, jnp.float32, -s, s)
    s1 = 1.0 / jnp.sqrt(signal_shape)
    s2 = 1.0 / jnp.sqrt(HIDDEN)
    return {
        "w1": u(ks[0], (HIDDEN, signal_shape), s1),   # dense1.weight (20, S)
        "b1": u(ks[1], (HIDDEN,), s1),                # dense1.bias   (20,)
        "w2": u(ks[2], (OUT, HIDDEN), s2),            # dense2.weight (1, 20)
        "b2": u(ks[3], (OUT,), s2),                   # dense2.bias   (1,)
    }


if __name__ == "__main__":
    SIGNAL_SHAPE = 32  # small stand-in for the default 100

    key = jax.random.PRNGKey(0)
    k_x, k_p = jax.random.split(key)
    params = init_params(k_p, SIGNAL_SHAPE)
    prepared = prepare_params(params)   # done once, outside the hot path

    # Input: anything with 64*SIGNAL_SHAPE elements (the module views it).
    x = jax.random.normal(k_x, (BATCH, SIGNAL_SHAPE), jnp.float32)

    out = critic_x_forward(x, prepared)
    jax.block_until_ready(out)
    assert out.shape == (1, BATCH, OUT)

    # Pure-JAX reference of the exact forward pass, for sanity.
    def ref(x, p):
        x2 = x.reshape(1, BATCH, SIGNAL_SHAPE).astype(jnp.float32)
        h = x2 @ p["w1"].T + p["b1"]
        return h @ p["w2"].T + p["b2"]

    assert jnp.allclose(out, ref(x, params), atol=1e-5), "mismatch vs reference"
    print("KERNEL_OK")
</pallas_src>

<mosaic_0001>
module attributes {stable_mosaic.version = 11 : i64} {
  func.func @critic_x_kernel(%arg0: memref<64x32xf32, #tpu.memory_space<vmem>>, %arg1: memref<32x20xf32, #tpu.memory_space<vmem>>, %arg2: memref<1x20xf32, #tpu.memory_space<vmem>>, %arg3: memref<20x1xf32, #tpu.memory_space<vmem>>, %arg4: memref<1x1xf32, #tpu.memory_space<vmem>>, %arg5: memref<64x1xf32, #tpu.memory_space<vmem>>) attributes {dimension_semantics = [], scalar_prefetch = 0 : i64, scratch_operands = 0 : i64, tpu.core_type = #tpu.core_type<tc>} {
    %c0 = arith.constant 0 : index
    %c0_0 = arith.constant 0 : index
    %0 = vector.load %arg0[%c0, %c0_0] : memref<64x32xf32, #tpu.memory_space<vmem>>, vector<64x32xf32>
    %c0_1 = arith.constant 0 : index
    %c0_2 = arith.constant 0 : index
    %1 = vector.load %arg1[%c0_1, %c0_2] : memref<32x20xf32, #tpu.memory_space<vmem>>, vector<32x20xf32>
    %cst = arith.constant dense<0.000000e+00> : vector<64x20xf32>
    %2 = tpu.matmul %0, %1, %cst {dimension_numbers = #tpu.dot_dimension_numbers<[1], [0], [0], [1], [0, 0, 1, 1], [], []>} : vector<64x32xf32>, vector<32x20xf32>, vector<64x20xf32> -> vector<64x20xf32>
    %c0_3 = arith.constant 0 : index
    %c0_4 = arith.constant 0 : index
    %3 = vector.load %arg2[%c0_3, %c0_4] : memref<1x20xf32, #tpu.memory_space<vmem>>, vector<1x20xf32>
    %4 = vector.broadcast %3 : vector<1x20xf32> to vector<64x20xf32>
    %5 = arith.addf %2, %4 : vector<64x20xf32>
    %c0_5 = arith.constant 0 : index
    %c0_6 = arith.constant 0 : index
    %6 = vector.load %arg3[%c0_5, %c0_6] : memref<20x1xf32, #tpu.memory_space<vmem>>, vector<20x1xf32>
    %cst_7 = arith.constant dense<0.000000e+00> : vector<64x1xf32>
    %7 = tpu.matmul %5, %6, %cst_7 {dimension_numbers = #tpu.dot_dimension_numbers<[1], [0], [0], [1], [0, 0, 1, 1], [], []>} : vector<64x20xf32>, vector<20x1xf32>, vector<64x1xf32> -> vector<64x1xf32>
    %c0_8 = arith.constant 0 : index
    %c0_9 = arith.constant 0 : index
    %8 = vector.load %arg4[%c0_8, %c0_9] : memref<1x1xf32, #tpu.memory_space<vmem>>, vector<1x1xf32>
    %9 = vector.broadcast %8 : vector<1x1xf32> to vector<64x1xf32>
    %10 = arith.addf %7, %9 : vector<64x1xf32>
    %c0_10 = arith.constant 0 : index
    %c0_11 = arith.constant 0 : index
    %11 = vector.load %arg5[%c0_10, %c0_11] : memref<64x1xf32, #tpu.memory_space<vmem>>, vector<64x1xf32>
    tpu.vector_store %arg5[%c0_10, %c0_11], %10 {strides = array<i32>} : memref<64x1xf32, #tpu.memory_space<vmem>>, vector<64x1xf32>,
    return
  }
}

</mosaic_0001>

<llo_original>
// kernel: tpu_custom_call.1
$region0: #{tpu_custom_call.1}
  #allocation0 [shape = 'u32[]', space=smem, size = 0x4, offset = 0x4, fixed_abs, tag = 'smem constant byte address 0x4 - core index']
  #allocation1 [shape = 'u32[144,128]{1,0:T(1,128)}', space=vmem, size = 0x12000, scoped, tag = 'internal scratch']
  #allocation2 [shape = 'f32[1,1]{1,0:T(1,128)S(1)}', space=vmem, size = 0x200, scoped, tag = 'scoped memory for tpu_custom_call.1']
  %s0 = inlined_call_operand.vmem [shape: f32[64,32], index: 0, kind: input, shape index: {}]
  %s1 = inlined_call_operand.vmem [shape: f32[32,20], index: 1, kind: input, shape index: {}]
  %s2 = inlined_call_operand.vmem [shape: f32[1,20], index: 2, kind: input, shape index: {}]
  %s3 = inlined_call_operand.vmem [shape: f32[20,1], index: 3, kind: input, shape index: {}]
  %s4 = inlined_call_operand.<no memory space> [shape: f32[1,1], index: 4, kind: input, shape index: {}]
  %s5 = inlined_call_operand.vmem [shape: f32[64,1], index: 5, kind: output, shape index: {}]
  %s6 = sld [smem:[#allocation0]]
  $region30: #{tpu_custom_call.1} parent=0
    _
  %s8 = ssub.s32 1, %s6
  %s9 = scalar_select 0, %s8, %s6
  %v10 = vstv %s4
  %11 = vst [vmem:[#allocation2] sm:$0x1] %v10
  // Predicated region
  $region2: #{tpu_custom_call.1} parent=0 // pred_check
    _
  $region3: #{tpu_custom_call.1} parent=0 // pred_check_branch
    %13 = sbr.rel (0) target = $region5
  $region4: #{tpu_custom_call.1} parent=0 // pred_region
    _
  $region5: #{tpu_custom_call.1} parent=0 // pred_fallthru
    _
  // Predicated region
  $region6: #{tpu_custom_call.1} parent=0 // pred_check
    _
  $region7: #{tpu_custom_call.1} parent=0 // pred_check_branch
    %15 = sbr.rel (0) target = $region9
  $region8: #{tpu_custom_call.1} parent=0 // pred_region
    _
  $region9: #{tpu_custom_call.1} parent=0 // pred_fallthru
    _
  // Predicated region
  $region10: #{tpu_custom_call.1} parent=0 // pred_check
    _
  $region11: #{tpu_custom_call.1} parent=0 // pred_check_branch
    %17 = sbr.rel (0) target = $region13
  $region12: #{tpu_custom_call.1} parent=0 // pred_region
    _
  $region13: #{tpu_custom_call.1} parent=0 // pred_fallthru
    _
  // Predicated region
  $region14: #{tpu_custom_call.1} parent=0 // pred_check
    _
  $region15: #{tpu_custom_call.1} parent=0 // pred_check_branch
    %19 = sbr.rel (0) target = $region17
  $region16: #{tpu_custom_call.1} parent=0 // pred_region
    _
  $region17: #{tpu_custom_call.1} parent=0 // pred_fallthru
    _
  // Predicated region
  $region18: #{tpu_custom_call.1} parent=0 // pred_check
    _
  $region19: #{tpu_custom_call.1} parent=0 // pred_check_branch
    %21 = sbr.rel (0) target = $region21
  $region20: #{tpu_custom_call.1} parent=0 // pred_region
    _
  $region21: #{tpu_custom_call.1} parent=0 // pred_fallthru
    _
  %v22 = vld [vmem:[%s0] sm:$0xff]
  %v23 = vld [vmem:[%s0 + $0x8] sm:$0xff]
  %v24 = vld [vmem:[%s0 + $0x10] sm:$0xff]
  %v25 = vld [vmem:[%s0 + $0x18] sm:$0xff]
  %v26 = vld [vmem:[%s0 + $0x20] sm:$0xff]
  %v27 = vld [vmem:[%s0 + $0x28] sm:$0xff]
  %v28 = vld [vmem:[%s0 + $0x30] sm:$0xff]
  %v29 = vld [vmem:[%s0 + $0x38] sm:$0xff]
  %v30 = vld [vmem:[%s1] sm:$0xff]
  %v31 = vld [vmem:[%s1 + $0x8] sm:$0xff]
  %v32 = vld [vmem:[%s1 + $0x10] sm:$0xff]
  %v33 = vld [vmem:[%s1 + $0x18] sm:$0xff]
  %v34 = vld [vmem:[%s2] sm:$0x1]
  %v36 = vlaneseq
  %v37 = vshrl.u32 %v36, 7
  %v38 = vsub.s32 0, %v37
  %v39 = vrot.slane %v34, %v38
  %vm41 = vcmask 261120
  %v43 = vsel %vm41, %v22, 0
  %v46 = vsel %vm41, %v23, 0
  %v49 = vsel %vm41, %v24, 0
  %v52 = vsel %vm41, %v25, 0
  %v55 = vsel %vm41, %v26, 0
  %v58 = vsel %vm41, %v27, 0
  %v61 = vsel %vm41, %v28, 0
  %v64 = vsel %vm41, %v29, 0
  %66 = vmatprep.subr.mxu0 0.0
  %67 = vmatpush1.msra.mxu0 %v30
  %68 = vmatprep.subr.mxu0 0.0
  %69 = vmatpush1.msra.mxu0 %v31
  %70 = vmatprep.subr.mxu0 0.0
  %71 = vmatpush1.msra.mxu0 %v32
  %72 = vmatprep.subr.mxu0 0.0
  %73 = vmatpush1.msra.mxu0 %v33
  %74 = vmatprep.subr.mxu0 0.0
  %75 = vmatpush1.msra.mxu0 0.0
  %76 = vmatprep.subr.mxu0 0.0
  %77 = vmatpush1.msra.mxu0 0.0
  %78 = vmatprep.subr.mxu0 0.0
  %79 = vmatpush1.msra.mxu0 0.0
  %80 = vmatprep.subr.mxu0 0.0
  %81 = vmatpush1.msra.mxu0 0.0
  %82 = vmatprep.subr.mxu0 0.0
  %83 = vmatpush1.msra.mxu0 0.0
  %84 = vmatprep.subr.mxu0 0.0
  %85 = vmatpush1.msra.mxu0 0.0
  %86 = vmatprep.subr.mxu0 0.0
  %87 = vmatpush1.msra.mxu0 0.0
  %88 = vmatprep.subr.mxu0 0.0
  %89 = vmatpush1.msra.mxu0 0.0
  %90 = vmatprep.subr.mxu0 0.0
  %91 = vmatpush1.msra.mxu0 0.0
  %92 = vmatprep.subr.mxu0 0.0
  %93 = vmatpush1.msra.mxu0 0.0
  %94 = vmatprep.subr.mxu0 0.0
  %95 = vmatpush1.msra.mxu0 0.0
  %96 = vmatprep.subr.mxu0 0.0
  %97 = vmatpush1.msra.mxu0 0.0
  %98 = vmatprep.subr.mxu0 0.0
  %99 = vmatpush1.msra.mxu0 0.0
  %100 = vmatprep.subr.mxu0 0.0
  %101 = vmatpush1.msra.mxu0 0.0
  %102 = vmatprep.subr.mxu0 0.0
  %103 = vmatpush1.msra.mxu0 0.0
  %104 = vmatprep.subr.mxu0 0.0
  %105 = vmatpush1.msra.mxu0 0.0
  %106 = vmatprep.subr.mxu0 0.0
  %107 = vmatpush1.msra.mxu0 0.0
  %108 = vmatprep.subr.mxu0 0.0
  %109 = vmatpush1.msra.mxu0 0.0
  %110 = vmatprep.subr.mxu0 0.0
  %111 = vmatpush1.msra.mxu0 0.0
  %112 = vmatprep.subr.mxu0 0.0
  %113 = vmatpush1.msra.mxu0 0.0
  %114 = vmatprep.subr.mxu0 0.0
  %115 = vmatpush1.msra.mxu0 0.0
  %116 = vmatprep.subr.mxu0 0.0
  %117 = vmatpush1.msra.mxu0 0.0
  %118 = vmatprep.subr.mxu0 0.0
  %119 = vmatpush1.msra.mxu0 0.0
  %120 = vmatprep.subr.mxu0 0.0
  %121 = vmatpush1.msra.mxu0 0.0
  %122 = vmatprep.subr.mxu0 0.0
  %123 = vmatpush1.msra.mxu0 0.0
  %124 = vmatprep.subr.mxu0 0.0
  %125 = vmatpush1.msra.mxu0 0.0
  %126 = vmatprep.subr.mxu0 0.0
  %127 = vmatpush1.msra.mxu0 0.0
  %128 = vmatprep.subr.mxu0 0.0
  %129 = vmatpush1.msra.mxu0 0.0
  %130 = vmatprep.mubr.f32.mxu0 0.0
  %131 = vmatmul.mubr.f32.gmra.mrb[0].mxu0 %v43
  %v132 = vpop.f32.mrb[0].mxu0
  %v133 = vadd.f32 %v39, %v132
  %v134 = vpop.f32.mrb[0].mxu0
  %135 = vmatprep.mubr.f32.mxu0 0.0
  %136 = vmatmul.mubr.f32.gmra.mrb[0].mxu0 %v46
  %v137 = vpop.f32.mrb[0].mxu0
  %v138 = vadd.f32 %v39, %v137
  %v139 = vpop.f32.mrb[0].mxu0
  %140 = vmatprep.mubr.f32.mxu0 0.0
  %141 = vmatmul.mubr.f32.gmra.mrb[0].mxu0 %v49
  %v142 = vpop.f32.mrb[0].mxu0
  %v143 = vadd.f32 %v39, %v142
  %v144 = vpop.f32.mrb[0].mxu0
  %145 = vmatprep.mubr.f32.mxu0 0.0
  %146 = vmatmul.mubr.f32.gmra.mrb[0].mxu0 %v52
  %v147 = vpop.f32.mrb[0].mxu0
  %v148 = vadd.f32 %v39, %v147
  %v149 = vpop.f32.mrb[0].mxu0
  %150 = vmatprep.mubr.f32.mxu0 0.0
  %151 = vmatmul.mubr.f32.gmra.mrb[0].mxu0 %v55
  %v152 = vpop.f32.mrb[0].mxu0
  %v153 = vadd.f32 %v39, %v152
  %v154 = vpop.f32.mrb[0].mxu0
  %155 = vmatprep.mubr.f32.mxu0 0.0
  %156 = vmatmul.mubr.f32.gmra.mrb[0].mxu0 %v58
  %v157 = vpop.f32.mrb[0].mxu0
  %v158 = vadd.f32 %v39, %v157
  %v159 = vpop.f32.mrb[0].mxu0
  %160 = vmatprep.mubr.f32.mxu0 0.0
  %161 = vmatmul.mubr.f32.gmra.mrb[0].mxu0 %v61
  %v162 = vpop.f32.mrb[0].mxu0
  %v163 = vadd.f32 %v39, %v162
  %v164 = vpop.f32.mrb[0].mxu0
  %165 = vmatprep.mubr.f32.mxu0 0.0
  %166 = vmatmul.mubr.f32.gmra.mrb[0].mxu0 %v64
  %v167 = vpop.f32.mrb[0].mxu0
  %v168 = vadd.f32 %v39, %v167
  %v169 = vpop.f32.mrb[0].mxu0
  %170 = vdwg.mxu0
  %v171 = vld [vmem:[%s3] sm:$0xff]
  %v172 = vld [vmem:[%s3 + $0x8] sm:$0xff]
  %v173 = vld [vmem:[%s3 + $0x10] sm:$0xf]
  %v174 = vld [vmem:[#allocation2] sm:$0x1]
  %v176 = vlaneseq
  %v177 = vshrl.u32 %v176, 7
  %v178 = vsub.s32 0, %v177
  %v179 = vrot.slane %v174, %v178
  %vm181 = vcmask 162816
  %v183 = vsel %vm181, %v133, 0
  %v186 = vsel %vm181, %v138, 0
  %v189 = vsel %vm181, %v143, 0
  %v192 = vsel %vm181, %v148, 0
  %v195 = vsel %vm181, %v153, 0
  %v198 = vsel %vm181, %v158, 0
  %v201 = vsel %vm181, %v163, 0
  %v204 = vsel %vm181, %v168, 0
  %vm206 = vcmask 1043456
  %v208 = vsel %vm206, %v173, 0
  %210 = vmatprep.subr.mxu0 0.0
  %211 = vmatpush1.msra.mxu0 %v171
  %212 = vmatprep.subr.mxu0 0.0
  %213 = vmatpush1.msra.mxu0 %v172
  %214 = vmatprep.subr.mxu0 0.0
  %215 = vmatpush1.msra.mxu0 %v208
  %216 = vmatprep.subr.mxu0 0.0
  %217 = vmatpush1.msra.mxu0 0.0
  %218 = vmatprep.subr.mxu0 0.0
  %219 = vmatpush1.msra.mxu0 0.0
  %220 = vmatprep.subr.mxu0 0.0
  %221 = vmatpush1.msra.mxu0 0.0
  %222 = vmatprep.subr.mxu0 0.0
  %223 = vmatpush1.msra.mxu0 0.0
  %224 = vmatprep.subr.mxu0 0.0
  %225 = vmatpush1.msra.mxu0 0.0
  %226 = vmatprep.subr.mxu0 0.0
  %227 = vmatpush1.msra.mxu0 0.0
  %228 = vmatprep.subr.mxu0 0.0
  %229 = vmatpush1.msra.mxu0 0.0
  %230 = vmatprep.subr.mxu0 0.0
  %231 = vmatpush1.msra.mxu0 0.0
  %232 = vmatprep.subr.mxu0 0.0
  %233 = vmatpush1.msra.mxu0 0.0
  %234 = vmatprep.subr.mxu0 0.0
  %235 = vmatpush1.msra.mxu0 0.0
  %236 = vmatprep.subr.mxu0 0.0
  %237 = vmatpush1.msra.mxu0 0.0
  %238 = vmatprep.subr.mxu0 0.0
  %239 = vmatpush1.msra.mxu0 0.0
  %240 = vmatprep.subr.mxu0 0.0
  %241 = vmatpush1.msra.mxu0 0.0
  %242 = vmatprep.subr.mxu0 0.0
  %243 = vmatpush1.msra.mxu0 0.0
  %244 = vmatprep.subr.mxu0 0.0
  %245 = vmatpush1.msra.mxu0 0.0
  %246 = vmatprep.subr.mxu0 0.0
  %247 = vmatpush1.msra.mxu0 0.0
  %248 = vmatprep.subr.mxu0 0.0
  %249 = vmatpush1.msra.mxu0 0.0
  %250 = vmatprep.subr.mxu0 0.0
  %251 = vmatpush1.msra.mxu0 0.0
  %252 = vmatprep.subr.mxu0 0.0
  %253 = vmatpush1.msra.mxu0 0.0
  %254 = vmatprep.subr.mxu0 0.0
  %255 = vmatpush1.msra.mxu0 0.0
  %256 = vmatprep.subr.mxu0 0.0
  %257 = vmatpush1.msra.mxu0 0.0
  %258 = vmatprep.subr.mxu0 0.0
  %259 = vmatpush1.msra.mxu0 0.0
  %260 = vmatprep.subr.mxu0 0.0
  %261 = vmatpush1.msra.mxu0 0.0
  %262 = vmatprep.subr.mxu0 0.0
  %263 = vmatpush1.msra.mxu0 0.0
  %264 = vmatprep.subr.mxu0 0.0
  %265 = vmatpush1.msra.mxu0 0.0
  %266 = vmatprep.subr.mxu0 0.0
  %267 = vmatpush1.msra.mxu0 0.0
  %268 = vmatprep.subr.mxu0 0.0
  %269 = vmatpush1.msra.mxu0 0.0
  %270 = vmatprep.subr.mxu0 0.0
  %271 = vmatpush1.msra.mxu0 0.0
  %272 = vmatprep.subr.mxu0 0.0
  %273 = vmatpush1.msra.mxu0 0.0
  %274 = vmatprep.mubr.f32.mxu0 0.0
  %275 = vmatmul.mubr.f32.gmra.mrb[0].mxu0 %v183
  %v276 = vpop.f32.mrb[0].mxu0
  %v277 = vadd.f32 %v179, %v276
  %v278 = vpop.f32.mrb[0].mxu0
  %279 = vmatprep.mubr.f32.mxu0 0.0
  %280 = vmatmul.mubr.f32.gmra.mrb[0].mxu0 %v186
  %v281 = vpop.f32.mrb[0].mxu0
  %v282 = vadd.f32 %v179, %v281
  %v283 = vpop.f32.mrb[0].mxu0
  %284 = vmatprep.mubr.f32.mxu0 0.0
  %285 = vmatmul.mubr.f32.gmra.mrb[0].mxu0 %v189
  %v286 = vpop.f32.mrb[0].mxu0
  %v287 = vadd.f32 %v179, %v286
  %v288 = vpop.f32.mrb[0].mxu0
  %289 = vmatprep.mubr.f32.mxu0 0.0
  %290 = vmatmul.mubr.f32.gmra.mrb[0].mxu0 %v192
  %v291 = vpop.f32.mrb[0].mxu0
  %v292 = vadd.f32 %v179, %v291
  %v293 = vpop.f32.mrb[0].mxu0
  %294 = vmatprep.mubr.f32.mxu0 0.0
  %295 = vmatmul.mubr.f32.gmra.mrb[0].mxu0 %v195
  %v296 = vpop.f32.mrb[0].mxu0
  %v297 = vadd.f32 %v179, %v296
  %v298 = vpop.f32.mrb[0].mxu0
  %299 = vmatprep.mubr.f32.mxu0 0.0
  %300 = vmatmul.mubr.f32.gmra.mrb[0].mxu0 %v198
  %v301 = vpop.f32.mrb[0].mxu0
  %v302 = vadd.f32 %v179, %v301
  %v303 = vpop.f32.mrb[0].mxu0
  %304 = vmatprep.mubr.f32.mxu0 0.0
  %305 = vmatmul.mubr.f32.gmra.mrb[0].mxu0 %v201
  %v306 = vpop.f32.mrb[0].mxu0
  %v307 = vadd.f32 %v179, %v306
  %v308 = vpop.f32.mrb[0].mxu0
  %309 = vmatprep.mubr.f32.mxu0 0.0
  %310 = vmatmul.mubr.f32.gmra.mrb[0].mxu0 %v204
  %v311 = vpop.f32.mrb[0].mxu0
  %v312 = vadd.f32 %v179, %v311
  %v313 = vpop.f32.mrb[0].mxu0
  %314 = vdwg.mxu0
  %vm315 = vcmask 7168
  %316 = vst.msk [vmem:[%s5] sm:$0xff] %vm315, %v277
  %317 = vst.msk [vmem:[%s5 + $0x8] sm:$0xff] %vm315, %v282
  %318 = vst.msk [vmem:[%s5 + $0x10] sm:$0xff] %vm315, %v287
  %319 = vst.msk [vmem:[%s5 + $0x18] sm:$0xff] %vm315, %v292
  %320 = vst.msk [vmem:[%s5 + $0x20] sm:$0xff] %vm315, %v297
  %321 = vst.msk [vmem:[%s5 + $0x28] sm:$0xff] %vm315, %v302
  %322 = vst.msk [vmem:[%s5 + $0x30] sm:$0xff] %vm315, %v307
  %323 = vst.msk [vmem:[%s5 + $0x38] sm:$0xff] %vm315, %v312
  // Predicated region
  $region22: #{tpu_custom_call.1} parent=0 // pred_check
    _
  $region23: #{tpu_custom_call.1} parent=0 // pred_check_branch
    %325 = sbr.rel (0) target = $region25
  $region24: #{tpu_custom_call.1} parent=0 // pred_region
    _
  $region25: #{tpu_custom_call.1} parent=0 // pred_fallthru
    _
  // Predicated region
  $region26: #{tpu_custom_call.1} parent=0 // pred_check
    _
  $region27: #{tpu_custom_call.1} parent=0 // pred_check_branch
    %327 = sbr.rel (0) target = $region29
  $region28: #{tpu_custom_call.1} parent=0 // pred_region
    _
  $region29: #{tpu_custom_call.1} parent=0 // pred_fallthru
    _

</llo_original>
